<compile_context>
chip_gen: v5e
topology: v5e:2x2
jax: 0.10.0
libtpu: 0.0.40
codegen_flags: <defaults>
</compile_context>

<pallas_src>
import jax
import jax.numpy as jnp
from jax.experimental import pallas as pl
from jax.experimental.pallas import tpu as pltpu

_FIELD_BITS = 10                       # 10-bit fields -> up to 1024 models / judges
_FIELD_MASK = (1 << _FIELD_BITS) - 1
_LANES = 128


def _round_up(x, m):
    return ((x + m - 1) // m) * m


def _elo_kernel(packed_ref, r_ref, t_ref, out_ref):
    # packed_ref : (rows, 128) int32  -- i | (j << 10) | (k << 20)
    # r_ref      : (M,) f32  SMEM     -- R embedding table
    # t_ref      : (J,) f32  SMEM     -- Theta table, pre-scaled by 1/sum(Theta)
    # out_ref    : (rows, 128) f32    -- p = theta_k * (R_i - R_j)
    M = r_ref.shape[0]
    J = t_ref.shape[0]

    packed = packed_ref[...]
    i_idx = packed & _FIELD_MASK
    j_idx = (packed >> _FIELD_BITS) & _FIELD_MASK
    k_idx = (packed >> (2 * _FIELD_BITS)) & _FIELD_MASK

    shape = packed.shape

    # Select-chain gathers against SMEM scalars (tables are tiny; this avoids
    # (M, T)/(J, T) one-hot intermediates and cross-sublane reductions).
    r0 = r_ref[0]
    r_i = jnp.full(shape, r0, jnp.float32)
    r_j = jnp.full(shape, r0, jnp.float32)
    for m in range(1, M):
        rm = r_ref[m]
        r_i = jnp.where(i_idx == m, rm, r_i)
        r_j = jnp.where(j_idx == m, rm, r_j)

    theta = jnp.full(shape, t_ref[0], jnp.float32)
    for jj in range(1, J):
        theta = jnp.where(k_idx == jj, t_ref[jj], theta)

    out_ref[...] = (theta * (r_i - r_j)).astype(out_ref.dtype)


def am_elo_forward(x, R_weight, Theta_weight, *, tile_rows=2048):
    """x: (N,3) int; R_weight: (num_model,1) f32; Theta_weight: (num_judge,1) f32.

    Returns p of shape (N, 1) float32, matching the PyTorch forward.
    """
    N = x.shape[0]
    M = int(R_weight.shape[0])
    J = int(Theta_weight.shape[0])
    if M > (_FIELD_MASK + 1) or J > (_FIELD_MASK + 1):
        # TODO(synk): widen index packing (e.g. two int32 streams) for >1024 models/judges.
        raise ValueError("am_elo_forward packing supports at most 1024 models/judges")

    x = x.astype(jnp.int32)
    packed = (x[:, 0]
              | (x[:, 1] << _FIELD_BITS)
              | (x[:, 2] << (2 * _FIELD_BITS)))                 # (N,) int32

    # Dense lane layout: (rows, 128), rows a multiple of 8 and of tile_rows.
    n_rows = pl.cdiv(max(N, 1), _LANES)
    n_rows = _round_up(n_rows, 8)
    tile_rows = max(8, min(tile_rows, n_rows))
    n_rows = _round_up(n_rows, tile_rows)
    n_pad = n_rows * _LANES

    packed = jnp.pad(packed, (0, n_pad - N)).reshape(n_rows, _LANES)

    r_smem = R_weight.astype(jnp.float32).reshape(M)
    theta_f32 = Theta_weight.astype(jnp.float32)
    # Pre-scale the tiny Theta table by 1/sum(Theta): same scalar division as
    # the reference per-element divide, so bit-identical results.
    t_smem = (theta_f32 / jnp.sum(theta_f32)).reshape(J)

    grid = (n_rows // tile_rows,)

    out = pl.pallas_call(
        _elo_kernel,
        out_shape=jax.ShapeDtypeStruct((n_rows, _LANES), jnp.float32),
        grid=grid,
        in_specs=[
            pl.BlockSpec((tile_rows, _LANES), lambda n: (n, 0)),   # packed indices
            pl.BlockSpec(memory_space=pltpu.MemorySpace.SMEM),     # R table
            pl.BlockSpec(memory_space=pltpu.MemorySpace.SMEM),     # Theta / sum(Theta)
        ],
        out_specs=pl.BlockSpec((tile_rows, _LANES), lambda n: (n, 0)),
        compiler_params=pltpu.CompilerParams(
            dimension_semantics=("parallel",),
            vmem_limit_bytes=32 * 1024 * 1024,
        ),
    )(packed, r_smem, t_smem)

    # Free layout plumbing back to the PyTorch (N, 1) shape.
    return out.reshape(-1)[:N].reshape(N, 1)


def _xavier_uniform(key, shape):
    # torch xavier_uniform_ on an (out, in) tensor: fan_in = shape[1], fan_out = shape[0]
    fan_in, fan_out = shape[1], shape[0]
    bound = (6.0 / (fan_in + fan_out)) ** 0.5
    return jax.random.uniform(key, shape, dtype=jnp.float32, minval=-bound, maxval=bound)


def _reference(x, R_weight, Theta_weight):
    i, j, k = x[:, 0], x[:, 1], x[:, 2]
    R_i = R_weight[i]            # (N, 1)
    R_j = R_weight[j]            # (N, 1)
    theta = Theta_weight[k] / jnp.sum(Theta_weight)
    return theta * (R_i - R_j)


if __name__ == "__main__":
    num_model, num_judge = 4, 3

    key = jax.random.PRNGKey(0)
    k_r, k_t, k_i, k_j, k_k = jax.random.split(key, 5)

    R_weight = _xavier_uniform(k_r, (num_model, 1))       # nn.Embedding(num_model, 1).weight
    Theta_weight = _xavier_uniform(k_t, (num_judge, 1))   # nn.Embedding(num_judge, 1).weight

    # Small test (single tile, matches the module's natural batch usage).
    N = 8
    model_a = jax.random.randint(k_i, (N,), 0, num_model, dtype=jnp.int32)
    model_b = jax.random.randint(k_j, (N,), 0, num_model, dtype=jnp.int32)
    judge = jax.random.randint(k_k, (N,), 0, num_judge, dtype=jnp.int32)
    x = jnp.stack([model_a, model_b, judge], axis=1)      # (N, 3) int32

    p = jax.block_until_ready(am_elo_forward(x, R_weight, Theta_weight))
    p_ref = _reference(x, R_weight, Theta_weight)
    assert p.shape == (N, 1), p.shape
    assert jnp.allclose(p, p_ref, atol=1e-6, rtol=1e-5), (p, p_ref)

    # Second check exercising multiple grid steps (small tile on purpose).
    N2 = 3000
    k_i2, k_j2, k_k2 = jax.random.split(k_k, 3)
    x2 = jnp.stack([
        jax.random.randint(k_i2, (N2,), 0, num_model, dtype=jnp.int32),
        jax.random.randint(k_j2, (N2,), 0, num_model, dtype=jnp.int32),
        jax.random.randint(k_k2, (N2,), 0, num_judge, dtype=jnp.int32),
    ], axis=1)
    p2 = jax.block_until_ready(am_elo_forward(x2, R_weight, Theta_weight, tile_rows=8))
    p2_ref = _reference(x2, R_weight, Theta_weight)
    assert p2.shape == (N2, 1), p2.shape
    assert jnp.allclose(p2, p2_ref, atol=1e-6, rtol=1e-5)

    print("KERNEL_OK")
</pallas_src>

<mosaic_0001>
module attributes {stable_mosaic.version = 11 : i64} {
  func.func @_elo_kernel(%arg0: i32, %arg1: memref<8x128xi32, #tpu.memory_space<vmem>>, %arg2: memref<4xf32, #tpu.memory_space<smem>>, %arg3: memref<3xf32, #tpu.memory_space<smem>>, %arg4: memref<8x128xf32, #tpu.memory_space<vmem>>) attributes {dimension_semantics = [#tpu.dimension_semantics<parallel>], iteration_bounds = array<i64: 1>, scalar_prefetch = 0 : i64, scratch_operands = 0 : i64, tpu.core_type = #tpu.core_type<tc>, window_params = [{transform_indices = @transform_0, window_bounds = array<i64: 8, 128>}, {transform_indices = @transform_1, window_bounds = array<i64: 4>}, {transform_indices = @transform_2, window_bounds = array<i64: 3>}, {transform_indices = @transform_3, window_bounds = array<i64: 8, 128>}]} {
    %c0 = arith.constant 0 : index
    %c0_0 = arith.constant 0 : index
    %0 = vector.load %arg1[%c0, %c0_0] : memref<8x128xi32, #tpu.memory_space<vmem>>, vector<8x128xi32>
    %c1023_i32 = arith.constant 1023 : i32
    %1 = vector.broadcast %c1023_i32 : i32 to vector<8x128xi32>
    %2 = arith.andi %0, %1 : vector<8x128xi32>
    %c10_i32 = arith.constant 10 : i32
    %3 = vector.broadcast %c10_i32 : i32 to vector<8x128xi32>
    %4 = arith.shrsi %0, %3 : vector<8x128xi32>
    %c1023_i32_1 = arith.constant 1023 : i32
    %5 = vector.broadcast %c1023_i32_1 : i32 to vector<8x128xi32>
    %6 = arith.andi %4, %5 : vector<8x128xi32>
    %c20_i32 = arith.constant 20 : i32
    %7 = vector.broadcast %c20_i32 : i32 to vector<8x128xi32>
    %8 = arith.shrsi %0, %7 : vector<8x128xi32>
    %c1023_i32_2 = arith.constant 1023 : i32
    %9 = vector.broadcast %c1023_i32_2 : i32 to vector<8x128xi32>
    %10 = arith.andi %8, %9 : vector<8x128xi32>
    %c0_3 = arith.constant 0 : index
    %11 = memref.load %arg2[%c0_3] : memref<4xf32, #tpu.memory_space<smem>>
    %12 = vector.broadcast %11 : f32 to vector<8x128xf32>
    %13 = vector.broadcast %11 : f32 to vector<8x128xf32>
    %c1 = arith.constant 1 : index
    %14 = memref.load %arg2[%c1] : memref<4xf32, #tpu.memory_space<smem>>
    %c1_i32 = arith.constant 1 : i32
    %15 = vector.broadcast %c1_i32 : i32 to vector<8x128xi32>
    %16 = arith.cmpi eq, %2, %15 : vector<8x128xi32>
    %17 = vector.broadcast %14 : f32 to vector<8x128xf32>
    %18 = arith.select %16, %17, %12 : vector<8x128xi1>, vector<8x128xf32>
    %c1_i32_4 = arith.constant 1 : i32
    %19 = vector.broadcast %c1_i32_4 : i32 to vector<8x128xi32>
    %20 = arith.cmpi eq, %6, %19 : vector<8x128xi32>
    %21 = vector.broadcast %14 : f32 to vector<8x128xf32>
    %22 = arith.select %20, %21, %13 : vector<8x128xi1>, vector<8x128xf32>
    %c2 = arith.constant 2 : index
    %23 = memref.load %arg2[%c2] : memref<4xf32, #tpu.memory_space<smem>>
    %c2_i32 = arith.constant 2 : i32
    %24 = vector.broadcast %c2_i32 : i32 to vector<8x128xi32>
    %25 = arith.cmpi eq, %2, %24 : vector<8x128xi32>
    %26 = vector.broadcast %23 : f32 to vector<8x128xf32>
    %27 = arith.select %25, %26, %18 : vector<8x128xi1>, vector<8x128xf32>
    %c2_i32_5 = arith.constant 2 : i32
    %28 = vector.broadcast %c2_i32_5 : i32 to vector<8x128xi32>
    %29 = arith.cmpi eq, %6, %28 : vector<8x128xi32>
    %30 = vector.broadcast %23 : f32 to vector<8x128xf32>
    %31 = arith.select %29, %30, %22 : vector<8x128xi1>, vector<8x128xf32>
    %c3 = arith.constant 3 : index
    %32 = memref.load %arg2[%c3] : memref<4xf32, #tpu.memory_space<smem>>
    %c3_i32 = arith.constant 3 : i32
    %33 = vector.broadcast %c3_i32 : i32 to vector<8x128xi32>
    %34 = arith.cmpi eq, %2, %33 : vector<8x128xi32>
    %35 = vector.broadcast %32 : f32 to vector<8x128xf32>
    %36 = arith.select %34, %35, %27 : vector<8x128xi1>, vector<8x128xf32>
    %c3_i32_6 = arith.constant 3 : i32
    %37 = vector.broadcast %c3_i32_6 : i32 to vector<8x128xi32>
    %38 = arith.cmpi eq, %6, %37 : vector<8x128xi32>
    %39 = vector.broadcast %32 : f32 to vector<8x128xf32>
    %40 = arith.select %38, %39, %31 : vector<8x128xi1>, vector<8x128xf32>
    %c0_7 = arith.constant 0 : index
    %41 = memref.load %arg3[%c0_7] : memref<3xf32, #tpu.memory_space<smem>>
    %42 = vector.broadcast %41 : f32 to vector<8x128xf32>
    %c1_i32_8 = arith.constant 1 : i32
    %43 = vector.broadcast %c1_i32_8 : i32 to vector<8x128xi32>
    %44 = arith.cmpi eq, %10, %43 : vector<8x128xi32>
    %c1_9 = arith.constant 1 : index
    %45 = memref.load %arg3[%c1_9] : memref<3xf32, #tpu.memory_space<smem>>
    %46 = vector.broadcast %45 : f32 to vector<8x128xf32>
    %47 = arith.select %44, %46, %42 : vector<8x128xi1>, vector<8x128xf32>
    %c2_i32_10 = arith.constant 2 : i32
    %48 = vector.broadcast %c2_i32_10 : i32 to vector<8x128xi32>
    %49 = arith.cmpi eq, %10, %48 : vector<8x128xi32>
    %c2_11 = arith.constant 2 : index
    %50 = memref.load %arg3[%c2_11] : memref<3xf32, #tpu.memory_space<smem>>
    %51 = vector.broadcast %50 : f32 to vector<8x128xf32>
    %52 = arith.select %49, %51, %47 : vector<8x128xi1>, vector<8x128xf32>
    %53 = arith.subf %36, %40 : vector<8x128xf32>
    %54 = arith.mulf %52, %53 : vector<8x128xf32>
    %c0_12 = arith.constant 0 : index
    %c0_13 = arith.constant 0 : index
    %55 = vector.load %arg4[%c0_12, %c0_13] : memref<8x128xf32, #tpu.memory_space<vmem>>, vector<8x128xf32>
    tpu.vector_store %arg4[%c0_12, %c0_13], %54 {strides = array<i32>} : memref<8x128xf32, #tpu.memory_space<vmem>>, vector<8x128xf32>,
    return
  }
  func.func @transform_0(%arg0: i32) -> (i32, i32) {
    %c0_i32 = arith.constant 0 : i32
    %c0_i32_0 = arith.constant 0 : i32
    return %arg0, %c0_i32 : i32, i32
  }
  func.func @transform_1(%arg0: i32) -> i32 {
    %c0_i32 = arith.constant 0 : i32
    %c0_i32_0 = arith.constant 0 : i32
    return %c0_i32 : i32
  }
  func.func @transform_2(%arg0: i32) -> i32 {
    %c0_i32 = arith.constant 0 : i32
    %c0_i32_0 = arith.constant 0 : i32
    return %c0_i32 : i32
  }
  func.func @transform_3(%arg0: i32) -> (i32, i32) {
    %c0_i32 = arith.constant 0 : i32
    %c0_i32_0 = arith.constant 0 : i32
    return %arg0, %c0_i32 : i32, i32
  }
}

</mosaic_0001>

<llo_original>
// kernel: tpu_custom_call.1
$region0: #{tpu_custom_call.1}
  #allocation0 [shape = 'u32[]', space=smem, size = 0x4, offset = 0x4, fixed_abs, tag = 'smem constant byte address 0x4 - core index']
  #allocation1 [shape = 'u32[72,128]{1,0:T(1,128)}', space=vmem, size = 0x9000, scoped, tag = 'internal scratch']
  %s0 = inlined_call_operand.hbm [shape: s32[8,128], index: 0, kind: input, shape index: {}]
  %s1 = inlined_call_operand.hbm [shape: f32[4], index: 1, kind: input, shape index: {}]
  %s2 = inlined_call_operand.vmem [shape: f32[3], index: 2, kind: input, shape index: {}]
  %s3 = inlined_call_operand.hbm [shape: f32[8,128], index: 3, kind: output, shape index: {}]
  %s4 = sld [smem:[#allocation0]]
  $region34: #{tpu_custom_call.1} parent=0
    _
  %s6 = ssub.s32 1, %s4
  %s7 = scalar_select 0, %s6, %s4
  $region1: #{tpu_custom_call.1} parent=0
    #allocation2 [shape = 'u8[4096]{0}', space=vmem, size = 0x1000, scoped, tag = 'input window, operand 0, single buffered']
    #allocation3 [shape = 's32[1]{0}', space=sflag, size = 0x4, scoped, tag = 'scoped memory for tpu_custom_call.1']
    #allocation4 [shape = 's32[1]{0}', space=sflag, size = 0x4, scoped, tag = 'scoped memory for tpu_custom_call.1']
    #allocation5 [shape = 's32[1]{0}', space=sflag, size = 0x4, scoped, tag = 'scoped memory for tpu_custom_call.1']
    #allocation6 [shape = 's32[1]{0}', space=sflag, size = 0x4, scoped, tag = 'scoped memory for tpu_custom_call.1']
    #allocation7 [shape = 'u8[512]{0}', space=smem, size = 0x200, scoped, tag = 'input window, operand 1, single buffered']
    #allocation8 [shape = 'u8[512]{0}', space=smem, size = 0x200, scoped, tag = 'input window, operand 2, single buffered']
    #allocation9 [shape = 'u8[4096]{0}', space=vmem, size = 0x1000, scoped, tag = 'output window, operand 0, single buffered']
    %8 = vsyncpa [#allocation3], 0
    %9 = vsyncpa [#allocation5], 0
    %10 = vsyncpa [#allocation6], 0
    %11 = vsyncpa [#allocation4], 0
    // Predicated region
    $region2: #{tpu_custom_call.1} parent=1 // pred_check
      _
    $region3: #{tpu_custom_call.1} parent=1 // pred_check_branch
      %13 = sbr.rel (0) target = $region5
    $region4: #{tpu_custom_call.1} parent=1 // pred_region
      %15 = vsyncadd [#allocation3], 0
      %s17 = sshll.u32 %s0, 4
      %s18 = int_to_ptr.hbm [resolvable:$true] %s17
      %s19 = sshll.u32 [#allocation2], 4
      %s20 = int_to_ptr.vmem [resolvable:$true] %s19
      %22 = dma.hbm_to_vmem [thread:$0]  %s18, 128, %s20, [#allocation3]
    $region5: #{tpu_custom_call.1} parent=1 // pred_fallthru
      _
    // Predicated region
    $region6: #{tpu_custom_call.1} parent=1 // pred_check
      _
    $region7: #{tpu_custom_call.1} parent=1 // pred_check_branch
      %24 = sbr.rel (0) target = $region9
    $region8: #{tpu_custom_call.1} parent=1 // pred_region
      %26 = vsyncadd [#allocation5], 0
      %s28 = sshll.u32 %s1, 4
      %s29 = int_to_ptr.hbm [resolvable:$true] %s28
      %31 = dma.hbm_to_smem %s29, 16, [#allocation7], [#allocation5]
    $region9: #{tpu_custom_call.1} parent=1 // pred_fallthru
      _
    // Predicated region
    $region10: #{tpu_custom_call.1} parent=1 // pred_check
      _
    $region11: #{tpu_custom_call.1} parent=1 // pred_check_branch
      %33 = sbr.rel (0) target = $region13
    $region12: #{tpu_custom_call.1} parent=1 // pred_region
      %35 = vsyncadd [#allocation6], 0
      %s37 = sshll.u32 %s2, 4
      %s38 = int_to_ptr.vmem [resolvable:$true] %s37
      %40 = dma.vmem_to_smem %s38, 16, [#allocation8], [#allocation6]
    $region13: #{tpu_custom_call.1} parent=1 // pred_fallthru
      _
    // Predicated region
    $region14: #{tpu_custom_call.1} parent=1 // pred_check
      _
    $region15: #{tpu_custom_call.1} parent=1 // pred_check_branch
      %42 = sbr.rel (0) target = $region17
    $region16: #{tpu_custom_call.1} parent=1 // pred_region
      %44 = dma.done [#allocation3], 128
    $region17: #{tpu_custom_call.1} parent=1 // pred_fallthru
      _
    // Predicated region
    $region18: #{tpu_custom_call.1} parent=1 // pred_check
      _
    $region19: #{tpu_custom_call.1} parent=1 // pred_check_branch
      %46 = sbr.rel (0) target = $region21
    $region20: #{tpu_custom_call.1} parent=1 // pred_region
      %48 = dma.done [#allocation5], 16
    $region21: #{tpu_custom_call.1} parent=1 // pred_fallthru
      _
    // Predicated region
    $region22: #{tpu_custom_call.1} parent=1 // pred_check
      _
    $region23: #{tpu_custom_call.1} parent=1 // pred_check_branch
      %50 = sbr.rel (0) target = $region25
    $region24: #{tpu_custom_call.1} parent=1 // pred_region
      %52 = dma.done [#allocation6], 16
    $region25: #{tpu_custom_call.1} parent=1 // pred_fallthru
      _
    %53 = sfence
    %v54 = vld [vmem:[#allocation2] sm:$0xff]
    %v55 = vand.u32 %v54, 1023
    %v56 = vshra.s32 %v54, 10
    %v57 = vand.u32 %v56, 1023
    %v58 = vshra.s32 %v54, 20
    %v59 = vand.u32 %v58, 1023
    %s60 = sld [smem:[#allocation7]]
    %v61 = vstv %s60
    %s62 = sld [smem:[#allocation7 + $0x1]]
    %vm63 = vcmp.eq.s32.totalorder %v55, 1
    %v64 = vstv %s62
    %v65 = vsel %vm63, %v64, %v61
    %vm66 = vcmp.eq.s32.totalorder %v57, 1
    %v67 = vsel %vm66, %v64, %v61
    %s68 = sld [smem:[#allocation7 + $0x2]]
    %vm69 = vcmp.eq.s32.totalorder %v55, 2
    %v70 = vstv %s68
    %v71 = vsel %vm69, %v70, %v65
    %vm72 = vcmp.eq.s32.totalorder %v57, 2
    %v73 = vsel %vm72, %v70, %v67
    %s74 = sld [smem:[#allocation7 + $0x3]]
    %vm75 = vcmp.eq.s32.totalorder %v55, 3
    %v76 = vstv %s74
    %v77 = vsel %vm75, %v76, %v71
    %vm78 = vcmp.eq.s32.totalorder %v57, 3
    %v79 = vsel %vm78, %v76, %v73
    %s80 = sld [smem:[#allocation8]]
    %v81 = vstv %s80
    %vm82 = vcmp.eq.s32.totalorder %v59, 1
    %s83 = sld [smem:[#allocation8 + $0x1]]
    %v84 = vstv %s83
    %v85 = vsel %vm82, %v84, %v81
    %vm86 = vcmp.eq.s32.totalorder %v59, 2
    %s87 = sld [smem:[#allocation8 + $0x2]]
    %v88 = vstv %s87
    %v89 = vsel %vm86, %v88, %v85
    %v90 = vsub.f32 %v77, %v79
    %v91 = vmul.f32 %v89, %v90
    %92 = vst [vmem:[#allocation9] sm:$0xff] %v91
    // Predicated region
    $region26: #{tpu_custom_call.1} parent=1 // pred_check
      _
    $region27: #{tpu_custom_call.1} parent=1 // pred_check_branch
      %94 = sbr.rel (0) target = $region29
    $region28: #{tpu_custom_call.1} parent=1 // pred_region
      %96 = vsyncadd [#allocation4], 0
      %s98 = sshll.u32 [#allocation9], 4
      %s99 = int_to_ptr.vmem [resolvable:$true] %s98
      %s100 = sshll.u32 %s3, 4
      %s101 = int_to_ptr.hbm [resolvable:$true] %s100
      %103 = dma.vmem_to_hbm [thread:$0]  %s99, 128, %s101, [#allocation4]
    $region29: #{tpu_custom_call.1} parent=1 // pred_fallthru
      _
    // Predicated region
    $region30: #{tpu_custom_call.1} parent=1 // pred_check
      _
    $region31: #{tpu_custom_call.1} parent=1 // pred_check_branch
      %105 = sbr.rel (0) target = $region33
    $region32: #{tpu_custom_call.1} parent=1 // pred_region
      %107 = dma.done [#allocation4], 128
    $region33: #{tpu_custom_call.1} parent=1 // pred_fallthru
      _
    %108 = vsyncpa [#allocation3], 1
    %109 = vsyncpa [#allocation4], 1
    %110 = vsyncpa [#allocation5], 1
    %111 = vsyncpa [#allocation6], 1

</llo_original>
